<compile_context>
chip_gen: v6e
topology: v6e:2x2x1
jax: 0.10.0
libtpu: 0.0.40
codegen_flags: <defaults>
</compile_context>

<pallas_src>
import jax
import jax.numpy as jnp
import numpy as np
from jax.experimental import pallas as pl
from jax.experimental.pallas import tpu as pltpu

LANE = 128


def _round_up(v, m):
    return (v + m - 1) // m * m


def _pad2d(w, rows, cols):
    out = jnp.zeros((rows, cols), w.dtype)
    return out.at[: w.shape[0], : w.shape[1]].set(w)


# ----------------------------------------------------------------------------
# Fused Pallas kernel: L x (GINConv + outer ReLU) + global_add_pool
# ----------------------------------------------------------------------------
def make_fused_gin_kernel(num_layers, dpad):
    def kernel(a_ref, p_ref, x_ref, *rest):
        w_refs = rest[: 4 * num_layers]
        xpool_ref = rest[4 * num_layers]       # [G, L*dpad] f32
        xs_ref = rest[4 * num_layers + 1]      # [N, L*dpad] f32

        a = a_ref[...]      # [N, N]    bf16 (exact integer edge counts)
        p = p_ref[...]      # [G, N]    bf16 (exact one-hot pooling matrix)
        h = x_ref[...]      # [N, fpad] f32  (zero-padded layer-0 input)

        for l in range(num_layers):
            w1 = w_refs[4 * l + 0][...]
            b1 = w_refs[4 * l + 1][...]
            w2 = w_refs[4 * l + 2][...]
            b2 = w_refs[4 * l + 3][...]
            # GINConv (eps = 0): MLP(h + sum_{in-neighbors} h)
            agg = jnp.dot(a, h.astype(jnp.bfloat16),
                          preferred_element_type=jnp.float32)
            z = jnp.dot(h + agg, w1, preferred_element_type=jnp.float32) + b1
            z = jnp.maximum(z, 0.0)                    # ReLU inside the MLP
            y = jnp.dot(z, w2, preferred_element_type=jnp.float32) + b2
            h = jnp.maximum(y, 0.0)                    # outer F.relu in forward()
            # Lane-aligned (multiple-of-128) direct slice writes; no concat,
            # no list of live per-layer activations.
            xs_ref[:, l * dpad:(l + 1) * dpad] = h
            xpool_ref[:, l * dpad:(l + 1) * dpad] = jnp.dot(
                p, h.astype(jnp.bfloat16), preferred_element_type=jnp.float32)

    return kernel


# ----------------------------------------------------------------------------
# Wrapper
# ----------------------------------------------------------------------------
def encoder_gin_forward(x, edge_index, batch, params, num_graphs):
    """Reproduces Encoder_GIN.forward.

    x:          [N, num_features] float32
    edge_index: [2, E] int32  (row 0 = src, row 1 = dst)
    batch:      [N] int32 graph assignment
    params:     list of (w1, b1, w2, b2) per layer
    returns (xpool_cat [G, L*dim], xs_cat [N, L*dim])
    """
    n, num_features = x.shape
    num_layers = len(params)
    dim = params[0][2].shape[1]

    fpad = _round_up(max(num_features, 1), LANE)
    dpad = _round_up(dim, LANE)

    # Glue: densify graph structure (plain JAX, not the hot path).
    src, dst = edge_index[0], edge_index[1]
    a = (jnp.zeros((n, n), jnp.float32)
         .at[dst, src].add(1.0).astype(jnp.bfloat16))            # exact counts
    p = (jnp.zeros((num_graphs, n), jnp.float32)
         .at[batch, jnp.arange(n)].set(1.0).astype(jnp.bfloat16))  # exact one-hot
    x_pad = _pad2d(x.astype(jnp.float32), n, fpad)

    flat_w = []
    for i, (w1, b1, w2, b2) in enumerate(params):
        in_pad = fpad if i == 0 else dpad
        flat_w += [
            _pad2d(w1, in_pad, dpad),
            _pad2d(b1.reshape(1, -1), 1, dpad),
            _pad2d(w2, dpad, dpad),
            _pad2d(b2.reshape(1, -1), 1, dpad),
        ]

    vmem_spec = pl.BlockSpec(memory_space=pltpu.MemorySpace.VMEM)
    in_specs = [vmem_spec] * (3 + len(flat_w))
    out_shape = (
        jax.ShapeDtypeStruct((num_graphs, num_layers * dpad), jnp.float32),
        jax.ShapeDtypeStruct((n, num_layers * dpad), jnp.float32),
    )
    out_specs = (vmem_spec, vmem_spec)

    # VMEM budget from actual buffer sizes (+ working set + 2x headroom),
    # capped by the physical VMEM of the running generation.
    in_bytes = sum(int(np.prod(t.shape)) * t.dtype.itemsize
                   for t in [a, p, x_pad] + flat_w)
    out_bytes = (num_graphs + n) * num_layers * dpad * 4
    work_bytes = 4 * n * dpad * 4                 # agg / z / y / h temporaries
    need = 2 * (in_bytes + out_bytes + work_bytes) + (4 << 20)
    try:
        phys = int(pltpu.get_tpu_info().vmem_capacity_bytes)
    except Exception:
        phys = 64 << 20                            # conservative (v7x) fallback
    vmem_limit = int(min(max(need, 16 << 20), int(phys * 0.85)))

    fused = pl.pallas_call(
        make_fused_gin_kernel(num_layers, dpad),
        out_shape=out_shape,
        in_specs=in_specs,
        out_specs=out_specs,
        compiler_params=pltpu.CompilerParams(vmem_limit_bytes=vmem_limit),
    )
    xpool_pad, xs_pad = fused(a, p, x_pad, *flat_w)

    # Strip the lane padding: [*, L*dpad] -> [*, L*dim].
    xpool = xpool_pad.reshape(num_graphs, num_layers, dpad)[:, :, :dim]
    xpool = xpool.reshape(num_graphs, num_layers * dim)
    xs_cat = xs_pad.reshape(n, num_layers, dpad)[:, :, :dim]
    xs_cat = xs_cat.reshape(n, num_layers * dim)
    return xpool, xs_cat


# ----------------------------------------------------------------------------
# Deterministic parameter init (synthetic, no checkpoint)
# ----------------------------------------------------------------------------
def init_params(key, num_features, dim, num_gc_layers):
    params = []
    for i in range(num_gc_layers):
        in_dim = num_features if i == 0 else dim
        key, k1, k2, k3, k4 = jax.random.split(key, 5)
        s1 = 1.0 / np.sqrt(in_dim)
        s2 = 1.0 / np.sqrt(dim)
        w1 = jax.random.uniform(k1, (in_dim, dim), jnp.float32, -s1, s1)
        b1 = jax.random.uniform(k2, (1, dim), jnp.float32, -s1, s1)
        w2 = jax.random.uniform(k3, (dim, dim), jnp.float32, -s2, s2)
        b2 = jax.random.uniform(k4, (1, dim), jnp.float32, -s2, s2)
        params.append((w1, b1, w2, b2))
    return params


# ----------------------------------------------------------------------------
# Reference (plain JAX, f32 -- matches the PyTorch module semantics)
# ----------------------------------------------------------------------------
def reference_forward(x, edge_index, batch, params, num_graphs):
    n = x.shape[0]
    src, dst = edge_index[0], edge_index[1]
    a = jnp.zeros((n, n), jnp.float32).at[dst, src].add(1.0)
    p = jnp.zeros((num_graphs, n), jnp.float32).at[batch, jnp.arange(n)].set(1.0)
    xs = []
    h = x
    for (w1, b1, w2, b2) in params:
        agg = a @ h
        z = jnp.maximum((h + agg) @ w1 + b1, 0.0)
        h = jnp.maximum(z @ w2 + b2, 0.0)
        xs.append(h)
    xpool = [p @ xi for xi in xs]
    return jnp.concatenate(xpool, axis=1), jnp.concatenate(xs, axis=1)


if __name__ == "__main__":
    num_features = 4
    dim = 32
    num_gc_layers = 3
    num_nodes = 8
    num_graphs = 2

    key = jax.random.PRNGKey(0)
    key, kx = jax.random.split(key)
    x = jax.random.normal(kx, (num_nodes, num_features), jnp.float32)

    # two 4-node ring graphs (bidirectional edges)
    edges = []
    for g in range(num_graphs):
        base = g * 4
        for j in range(4):
            a_, b_ = base + j, base + (j + 1) % 4
            edges.append((a_, b_))
            edges.append((b_, a_))
    edge_index = jnp.asarray(np.array(edges, dtype=np.int32).T)  # [2, E]
    batch = jnp.asarray(np.array([0, 0, 0, 0, 1, 1, 1, 1], dtype=np.int32))

    params = init_params(key, num_features, dim, num_gc_layers)

    xpool, xs_cat = encoder_gin_forward(x, edge_index, batch, params, num_graphs)
    jax.block_until_ready(xpool)
    jax.block_until_ready(xs_cat)

    ref_pool, ref_xs = reference_forward(x, edge_index, batch, params, num_graphs)
    # Tolerance relaxed vs the all-f32 version: the aggregation / pooling
    # matmuls use bf16 operands (f32 accumulation) per the perf review.
    np.testing.assert_allclose(np.asarray(xpool), np.asarray(ref_pool),
                               rtol=5e-2, atol=2e-2)
    np.testing.assert_allclose(np.asarray(xs_cat), np.asarray(ref_xs),
                               rtol=5e-2, atol=2e-2)

    assert xpool.shape == (num_graphs, num_gc_layers * dim)
    assert xs_cat.shape == (num_nodes, num_gc_layers * dim)
    print("KERNEL_OK")
</pallas_src>

<mosaic_0001>
module attributes {stable_mosaic.version = 11 : i64} {
  func.func @kernel(%arg0: memref<8x8xbf16, #tpu.memory_space<vmem>>, %arg1: memref<2x8xbf16, #tpu.memory_space<vmem>>, %arg2: memref<8x128xf32, #tpu.memory_space<vmem>>, %arg3: memref<128x128xf32, #tpu.memory_space<vmem>>, %arg4: memref<1x128xf32, #tpu.memory_space<vmem>>, %arg5: memref<128x128xf32, #tpu.memory_space<vmem>>, %arg6: memref<1x128xf32, #tpu.memory_space<vmem>>, %arg7: memref<128x128xf32, #tpu.memory_space<vmem>>, %arg8: memref<1x128xf32, #tpu.memory_space<vmem>>, %arg9: memref<128x128xf32, #tpu.memory_space<vmem>>, %arg10: memref<1x128xf32, #tpu.memory_space<vmem>>, %arg11: memref<128x128xf32, #tpu.memory_space<vmem>>, %arg12: memref<1x128xf32, #tpu.memory_space<vmem>>, %arg13: memref<128x128xf32, #tpu.memory_space<vmem>>, %arg14: memref<1x128xf32, #tpu.memory_space<vmem>>, %arg15: memref<2x384xf32, #tpu.memory_space<vmem>>, %arg16: memref<8x384xf32, #tpu.memory_space<vmem>>) attributes {dimension_semantics = [], scalar_prefetch = 0 : i64, scratch_operands = 0 : i64, tpu.core_type = #tpu.core_type<tc>} {
    %c0 = arith.constant 0 : index
    %c0_0 = arith.constant 0 : index
    %0 = vector.load %arg0[%c0, %c0_0] : memref<8x8xbf16, #tpu.memory_space<vmem>>, vector<8x8xbf16>
    %c0_1 = arith.constant 0 : index
    %c0_2 = arith.constant 0 : index
    %1 = vector.load %arg1[%c0_1, %c0_2] : memref<2x8xbf16, #tpu.memory_space<vmem>>, vector<2x8xbf16>
    %c0_3 = arith.constant 0 : index
    %c0_4 = arith.constant 0 : index
    %2 = vector.load %arg2[%c0_3, %c0_4] : memref<8x128xf32, #tpu.memory_space<vmem>>, vector<8x128xf32>
    %c0_5 = arith.constant 0 : index
    %c0_6 = arith.constant 0 : index
    %3 = vector.load %arg3[%c0_5, %c0_6] : memref<128x128xf32, #tpu.memory_space<vmem>>, vector<128x128xf32>
    %c0_7 = arith.constant 0 : index
    %c0_8 = arith.constant 0 : index
    %4 = vector.load %arg4[%c0_7, %c0_8] : memref<1x128xf32, #tpu.memory_space<vmem>>, vector<1x128xf32>
    %c0_9 = arith.constant 0 : index
    %c0_10 = arith.constant 0 : index
    %5 = vector.load %arg5[%c0_9, %c0_10] : memref<128x128xf32, #tpu.memory_space<vmem>>, vector<128x128xf32>
    %c0_11 = arith.constant 0 : index
    %c0_12 = arith.constant 0 : index
    %6 = vector.load %arg6[%c0_11, %c0_12] : memref<1x128xf32, #tpu.memory_space<vmem>>, vector<1x128xf32>
    %7 = arith.truncf %2 : vector<8x128xf32> to vector<8x128xbf16>
    %cst = arith.constant dense<0.000000e+00> : vector<8x128xf32>
    %8 = tpu.matmul %0, %7, %cst {dimension_numbers = #tpu.dot_dimension_numbers<[1], [0], [0], [1], [0, 0, 1, 1], [], []>} : vector<8x8xbf16>, vector<8x128xbf16>, vector<8x128xf32> -> vector<8x128xf32>
    %9 = arith.addf %2, %8 : vector<8x128xf32>
    %cst_13 = arith.constant dense<0.000000e+00> : vector<8x128xf32>
    %10 = tpu.matmul %9, %3, %cst_13 {dimension_numbers = #tpu.dot_dimension_numbers<[1], [0], [0], [1], [0, 0, 1, 1], [], []>} : vector<8x128xf32>, vector<128x128xf32>, vector<8x128xf32> -> vector<8x128xf32>
    %11 = vector.broadcast %4 : vector<1x128xf32> to vector<8x128xf32>
    %12 = arith.addf %10, %11 : vector<8x128xf32>
    %cst_14 = arith.constant 0.000000e+00 : f32
    %13 = vector.broadcast %cst_14 : f32 to vector<8x128xf32>
    %14 = arith.maximumf %12, %13 : vector<8x128xf32>
    %cst_15 = arith.constant dense<0.000000e+00> : vector<8x128xf32>
    %15 = tpu.matmul %14, %5, %cst_15 {dimension_numbers = #tpu.dot_dimension_numbers<[1], [0], [0], [1], [0, 0, 1, 1], [], []>} : vector<8x128xf32>, vector<128x128xf32>, vector<8x128xf32> -> vector<8x128xf32>
    %16 = vector.broadcast %6 : vector<1x128xf32> to vector<8x128xf32>
    %17 = arith.addf %15, %16 : vector<8x128xf32>
    %cst_16 = arith.constant 0.000000e+00 : f32
    %18 = vector.broadcast %cst_16 : f32 to vector<8x128xf32>
    %19 = arith.maximumf %17, %18 : vector<8x128xf32>
    %c0_17 = arith.constant 0 : index
    %c0_18 = arith.constant 0 : index
    %20 = vector.load %arg16[%c0_17, %c0_18] : memref<8x384xf32, #tpu.memory_space<vmem>>, vector<8x128xf32>
    tpu.vector_store %arg16[%c0_17, %c0_18], %19 {strides = array<i32>} : memref<8x384xf32, #tpu.memory_space<vmem>>, vector<8x128xf32>,
    %21 = arith.truncf %19 : vector<8x128xf32> to vector<8x128xbf16>
    %cst_19 = arith.constant dense<0.000000e+00> : vector<2x128xf32>
    %22 = tpu.matmul %1, %21, %cst_19 {dimension_numbers = #tpu.dot_dimension_numbers<[1], [0], [0], [1], [0, 0, 1, 1], [], []>} : vector<2x8xbf16>, vector<8x128xbf16>, vector<2x128xf32> -> vector<2x128xf32>
    %c0_20 = arith.constant 0 : index
    %c0_21 = arith.constant 0 : index
    %23 = vector.load %arg15[%c0_20, %c0_21] : memref<2x384xf32, #tpu.memory_space<vmem>>, vector<2x128xf32>
    tpu.vector_store %arg15[%c0_20, %c0_21], %22 {strides = array<i32>} : memref<2x384xf32, #tpu.memory_space<vmem>>, vector<2x128xf32>,
    %c0_22 = arith.constant 0 : index
    %c0_23 = arith.constant 0 : index
    %24 = vector.load %arg7[%c0_22, %c0_23] : memref<128x128xf32, #tpu.memory_space<vmem>>, vector<128x128xf32>
    %c0_24 = arith.constant 0 : index
    %c0_25 = arith.constant 0 : index
    %25 = vector.load %arg8[%c0_24, %c0_25] : memref<1x128xf32, #tpu.memory_space<vmem>>, vector<1x128xf32>
    %c0_26 = arith.constant 0 : index
    %c0_27 = arith.constant 0 : index
    %26 = vector.load %arg9[%c0_26, %c0_27] : memref<128x128xf32, #tpu.memory_space<vmem>>, vector<128x128xf32>
    %c0_28 = arith.constant 0 : index
    %c0_29 = arith.constant 0 : index
    %27 = vector.load %arg10[%c0_28, %c0_29] : memref<1x128xf32, #tpu.memory_space<vmem>>, vector<1x128xf32>
    %28 = arith.truncf %19 : vector<8x128xf32> to vector<8x128xbf16>
    %cst_30 = arith.constant dense<0.000000e+00> : vector<8x128xf32>
    %29 = tpu.matmul %0, %28, %cst_30 {dimension_numbers = #tpu.dot_dimension_numbers<[1], [0], [0], [1], [0, 0, 1, 1], [], []>} : vector<8x8xbf16>, vector<8x128xbf16>, vector<8x128xf32> -> vector<8x128xf32>
    %30 = arith.addf %19, %29 : vector<8x128xf32>
    %cst_31 = arith.constant dense<0.000000e+00> : vector<8x128xf32>
    %31 = tpu.matmul %30, %24, %cst_31 {dimension_numbers = #tpu.dot_dimension_numbers<[1], [0], [0], [1], [0, 0, 1, 1], [], []>} : vector<8x128xf32>, vector<128x128xf32>, vector<8x128xf32> -> vector<8x128xf32>
    %32 = vector.broadcast %25 : vector<1x128xf32> to vector<8x128xf32>
    %33 = arith.addf %31, %32 : vector<8x128xf32>
    %cst_32 = arith.constant 0.000000e+00 : f32
    %34 = vector.broadcast %cst_32 : f32 to vector<8x128xf32>
    %35 = arith.maximumf %33, %34 : vector<8x128xf32>
    %cst_33 = arith.constant dense<0.000000e+00> : vector<8x128xf32>
    %36 = tpu.matmul %35, %26, %cst_33 {dimension_numbers = #tpu.dot_dimension_numbers<[1], [0], [0], [1], [0, 0, 1, 1], [], []>} : vector<8x128xf32>, vector<128x128xf32>, vector<8x128xf32> -> vector<8x128xf32>
    %37 = vector.broadcast %27 : vector<1x128xf32> to vector<8x128xf32>
    %38 = arith.addf %36, %37 : vector<8x128xf32>
    %cst_34 = arith.constant 0.000000e+00 : f32
    %39 = vector.broadcast %cst_34 : f32 to vector<8x128xf32>
    %40 = arith.maximumf %38, %39 : vector<8x128xf32>
    %c0_35 = arith.constant 0 : index
    %c128 = arith.constant 128 : index
    %41 = vector.load %arg16[%c0_35, %c128] : memref<8x384xf32, #tpu.memory_space<vmem>>, vector<8x128xf32>
    tpu.vector_store %arg16[%c0_35, %c128], %40 {strides = array<i32>} : memref<8x384xf32, #tpu.memory_space<vmem>>, vector<8x128xf32>,
    %42 = arith.truncf %40 : vector<8x128xf32> to vector<8x128xbf16>
    %cst_36 = arith.constant dense<0.000000e+00> : vector<2x128xf32>
    %43 = tpu.matmul %1, %42, %cst_36 {dimension_numbers = #tpu.dot_dimension_numbers<[1], [0], [0], [1], [0, 0, 1, 1], [], []>} : vector<2x8xbf16>, vector<8x128xbf16>, vector<2x128xf32> -> vector<2x128xf32>
    %c0_37 = arith.constant 0 : index
    %c128_38 = arith.constant 128 : index
    %44 = vector.load %arg15[%c0_37, %c128_38] : memref<2x384xf32, #tpu.memory_space<vmem>>, vector<2x128xf32>
    tpu.vector_store %arg15[%c0_37, %c128_38], %43 {strides = array<i32>} : memref<2x384xf32, #tpu.memory_space<vmem>>, vector<2x128xf32>,
    %c0_39 = arith.constant 0 : index
    %c0_40 = arith.constant 0 : index
    %45 = vector.load %arg11[%c0_39, %c0_40] : memref<128x128xf32, #tpu.memory_space<vmem>>, vector<128x128xf32>
    %c0_41 = arith.constant 0 : index
    %c0_42 = arith.constant 0 : index
    %46 = vector.load %arg12[%c0_41, %c0_42] : memref<1x128xf32, #tpu.memory_space<vmem>>, vector<1x128xf32>
    %c0_43 = arith.constant 0 : index
    %c0_44 = arith.constant 0 : index
    %47 = vector.load %arg13[%c0_43, %c0_44] : memref<128x128xf32, #tpu.memory_space<vmem>>, vector<128x128xf32>
    %c0_45 = arith.constant 0 : index
    %c0_46 = arith.constant 0 : index
    %48 = vector.load %arg14[%c0_45, %c0_46] : memref<1x128xf32, #tpu.memory_space<vmem>>, vector<1x128xf32>
    %49 = arith.truncf %40 : vector<8x128xf32> to vector<8x128xbf16>
    %cst_47 = arith.constant dense<0.000000e+00> : vector<8x128xf32>
    %50 = tpu.matmul %0, %49, %cst_47 {dimension_numbers = #tpu.dot_dimension_numbers<[1], [0], [0], [1], [0, 0, 1, 1], [], []>} : vector<8x8xbf16>, vector<8x128xbf16>, vector<8x128xf32> -> vector<8x128xf32>
    %51 = arith.addf %40, %50 : vector<8x128xf32>
    %cst_48 = arith.constant dense<0.000000e+00> : vector<8x128xf32>
    %52 = tpu.matmul %51, %45, %cst_48 {dimension_numbers = #tpu.dot_dimension_numbers<[1], [0], [0], [1], [0, 0, 1, 1], [], []>} : vector<8x128xf32>, vector<128x128xf32>, vector<8x128xf32> -> vector<8x128xf32>
    %53 = vector.broadcast %46 : vector<1x128xf32> to vector<8x128xf32>
    %54 = arith.addf %52, %53 : vector<8x128xf32>
    %cst_49 = arith.constant 0.000000e+00 : f32
    %55 = vector.broadcast %cst_49 : f32 to vector<8x128xf32>
    %56 = arith.maximumf %54, %55 : vector<8x128xf32>
    %cst_50 = arith.constant dense<0.000000e+00> : vector<8x128xf32>
    %57 = tpu.matmul %56, %47, %cst_50 {dimension_numbers = #tpu.dot_dimension_numbers<[1], [0], [0], [1], [0, 0, 1, 1], [], []>} : vector<8x128xf32>, vector<128x128xf32>, vector<8x128xf32> -> vector<8x128xf32>
    %58 = vector.broadcast %48 : vector<1x128xf32> to vector<8x128xf32>
    %59 = arith.addf %57, %58 : vector<8x128xf32>
    %cst_51 = arith.constant 0.000000e+00 : f32
    %60 = vector.broadcast %cst_51 : f32 to vector<8x128xf32>
    %61 = arith.maximumf %59, %60 : vector<8x128xf32>
    %c0_52 = arith.constant 0 : index
    %c256 = arith.constant 256 : index
    %62 = vector.load %arg16[%c0_52, %c256] : memref<8x384xf32, #tpu.memory_space<vmem>>, vector<8x128xf32>
    tpu.vector_store %arg16[%c0_52, %c256], %61 {strides = array<i32>} : memref<8x384xf32, #tpu.memory_space<vmem>>, vector<8x128xf32>,
    %63 = arith.truncf %61 : vector<8x128xf32> to vector<8x128xbf16>
    %cst_53 = arith.constant dense<0.000000e+00> : vector<2x128xf32>
    %64 = tpu.matmul %1, %63, %cst_53 {dimension_numbers = #tpu.dot_dimension_numbers<[1], [0], [0], [1], [0, 0, 1, 1], [], []>} : vector<2x8xbf16>, vector<8x128xbf16>, vector<2x128xf32> -> vector<2x128xf32>
    %c0_54 = arith.constant 0 : index
    %c256_55 = arith.constant 256 : index
    %65 = vector.load %arg15[%c0_54, %c256_55] : memref<2x384xf32, #tpu.memory_space<vmem>>, vector<2x128xf32>
    tpu.vector_store %arg15[%c0_54, %c256_55], %64 {strides = array<i32>} : memref<2x384xf32, #tpu.memory_space<vmem>>, vector<2x128xf32>,
    return
  }
}

</mosaic_0001>

<llo_original>
// kernel: tpu_custom_call.1
$region0: #{tpu_custom_call.1}
  #allocation0 [shape = 'u32[]', space=smem, size = 0x4, offset = 0x4, fixed_abs, tag = 'smem constant byte address 0x4 - core index']
  #allocation1 [shape = 'u32[144,128]{1,0:T(1,128)}', space=vmem, size = 0x12000, scoped, tag = 'internal scratch']
  %s0 = inlined_call_operand.hbm [shape: bf16[8,8], index: 0, kind: input, shape index: {}]
  %s1 = inlined_call_operand.vmem [shape: bf16[2,8], index: 1, kind: input, shape index: {}]
  %s2 = inlined_call_operand.hbm [shape: f32[8,128], index: 2, kind: input, shape index: {}]
  %s3 = inlined_call_operand.hbm [shape: f32[128,128], index: 3, kind: input, shape index: {}]
  %s4 = inlined_call_operand.vmem [shape: f32[1,128], index: 4, kind: input, shape index: {}]
  %s5 = inlined_call_operand.hbm [shape: f32[128,128], index: 5, kind: input, shape index: {}]
  %s6 = inlined_call_operand.vmem [shape: f32[1,128], index: 6, kind: input, shape index: {}]
  %s7 = inlined_call_operand.hbm [shape: f32[128,128], index: 7, kind: input, shape index: {}]
  %s8 = inlined_call_operand.vmem [shape: f32[1,128], index: 8, kind: input, shape index: {}]
  %s9 = inlined_call_operand.hbm [shape: f32[128,128], index: 9, kind: input, shape index: {}]
  %s10 = inlined_call_operand.vmem [shape: f32[1,128], index: 10, kind: input, shape index: {}]
  %s11 = inlined_call_operand.hbm [shape: f32[128,128], index: 11, kind: input, shape index: {}]
  %s12 = inlined_call_operand.vmem [shape: f32[1,128], index: 12, kind: input, shape index: {}]
  %s13 = inlined_call_operand.hbm [shape: f32[128,128], index: 13, kind: input, shape index: {}]
  %s14 = inlined_call_operand.vmem [shape: f32[1,128], index: 14, kind: input, shape index: {}]
  %s15 = inlined_call_operand.hbm [shape: f32[2,384], index: 15, kind: output, shape index: {0}]
  %s16 = inlined_call_operand.hbm [shape: f32[8,384], index: 16, kind: output, shape index: {1}]
  %17 = xla_tuple %s15, %s16
  %s18 = sld [smem:[#allocation0]]
  $region110: #{tpu_custom_call.1} parent=0
    _
  %s20 = ssub.s32 1, %s18
  %s21 = scalar_select 0, %s20, %s18
  $region1: #{tpu_custom_call.1} parent=0
    #allocation2 [shape = 'u8[2048]{0}', space=vmem, size = 0x800, scoped, tag = 'input window, operand 0, single buffered']
    #allocation3 [shape = 's32[1]{0}', space=sflag, size = 0x4, scoped, tag = 'scoped memory for tpu_custom_call.1']
    #allocation4 [shape = 's32[1]{0}', space=sflag, size = 0x4, scoped, tag = 'scoped memory for tpu_custom_call.1']
    #allocation5 [shape = 'u8[4096]{0}', space=vmem, size = 0x1000, scoped, tag = 'input window, operand 2, single buffered']
    #allocation6 [shape = 's32[1]{0}', space=sflag, size = 0x4, scoped, tag = 'scoped memory for tpu_custom_call.1']
    #allocation7 [shape = 'u8[65536]{0}', space=vmem, size = 0x10000, scoped, tag = 'input window, operand 3, single buffered']
    #allocation8 [shape = 'u8[65536]{0}', space=vmem, size = 0x10000, scoped, tag = 'input window, operand 5, single buffered']
    #allocation9 [shape = 's32[1]{0}', space=sflag, size = 0x4, scoped, tag = 'scoped memory for tpu_custom_call.1']
    #allocation10 [shape = 'u8[65536]{0}', space=vmem, size = 0x10000, scoped, tag = 'input window, operand 7, single buffered']
    #allocation11 [shape = 'u8[65536]{0}', space=vmem, size = 0x10000, scoped, tag = 'input window, operand 9, single buffered']
    #allocation12 [shape = 's32[1]{0}', space=sflag, size = 0x4, scoped, tag = 'scoped memory for tpu_custom_call.1']
    #allocation13 [shape = 'u8[65536]{0}', space=vmem, size = 0x10000, scoped, tag = 'input window, operand 11, single buffered']
    #allocation14 [shape = 'u8[65536]{0}', space=vmem, size = 0x10000, scoped, tag = 'input window, operand 13, single buffered']
    #allocation15 [shape = 's32[1]{0}', space=sflag, size = 0x4, scoped, tag = 'scoped memory for tpu_custom_call.1']
    #allocation16 [shape = 'u8[3072]{0}', space=vmem, size = 0xc00, scoped, tag = 'output window, operand 0, single buffered']
    #allocation17 [shape = 'u8[12288]{0}', space=vmem, size = 0x3000, scoped, tag = 'output window, operand 1, single buffered']
    #allocation18 [shape = 's32[1]{0}', space=sflag, size = 0x4, scoped, tag = 'scoped memory for tpu_custom_call.1']
    %22 = vsyncpa [#allocation3], 0
    %23 = vsyncpa [#allocation6], 0
    %24 = vsyncpa [#allocation9], 0
    %25 = vsyncpa [#allocation12], 0
    %26 = vsyncpa [#allocation15], 0
    %27 = vsyncpa [#allocation4], 0
    %28 = vsyncpa [#allocation18], 0
    // Predicated region
    $region2: #{tpu_custom_call.1} parent=1 // pred_check
      _
    $region3: #{tpu_custom_call.1} parent=1 // pred_check_branch
      %30 = sbr.rel (0) target = $region5
    $region4: #{tpu_custom_call.1} parent=1 // pred_region
      %s32 = ssub.s32 64, 64
      %33 = vsyncadd [#allocation3], %s32
      %s35 = sshll.u32 [#allocation2], 4
      %s36 = int_to_ptr.vmem [resolvable:$true] %s35
      %38 = dma.hbm_to_vmem [thread:$0]  %s0, 64, %s36, [#allocation3]
    $region5: #{tpu_custom_call.1} parent=1 // pred_fallthru
      _
    // Predicated region
    $region6: #{tpu_custom_call.1} parent=1 // pred_check
      _
    $region7: #{tpu_custom_call.1} parent=1 // pred_check_branch
      %40 = sbr.rel (0) target = $region9
    $region8: #{tpu_custom_call.1} parent=1 // pred_region
      _
    $region9: #{tpu_custom_call.1} parent=1 // pred_fallthru
      _
    // Predicated region
    $region10: #{tpu_custom_call.1} parent=1 // pred_check
      _
    $region11: #{tpu_custom_call.1} parent=1 // pred_check_branch
      %42 = sbr.rel (0) target = $region13
    $region12: #{tpu_custom_call.1} parent=1 // pred_region
      %s44 = ssub.s32 128, 128
      %45 = vsyncadd [#allocation6], %s44
      %s47 = sshll.u32 [#allocation5], 4
      %s48 = int_to_ptr.vmem [resolvable:$true] %s47
      %50 = dma.hbm_to_vmem [thread:$0]  %s2, 128, %s48, [#allocation6]
    $region13: #{tpu_custom_call.1} parent=1 // pred_fallthru
      _
    // Predicated region
    $region14: #{tpu_custom_call.1} parent=1 // pred_check
      _
    $region15: #{tpu_custom_call.1} parent=1 // pred_check_branch
      %52 = sbr.rel (0) target = $region17
    $region16: #{tpu_custom_call.1} parent=1 // pred_region
      %s54 = ssub.s32 2048, 2048
      %55 = vsyncadd [#allocation6], %s54
      %s56 = sshll.u32 [#allocation7], 4
      %s57 = int_to_ptr.vmem [resolvable:$true] %s56
      %62 = dma.hbm_to_vmem [thread:$0]  %s3, 2048, %s57, [#allocation6], 128, 128, 8
    $region17: #{tpu_custom_call.1} parent=1 // pred_fallthru
      _
    // Predicated region
    $region18: #{tpu_custom_call.1} parent=1 // pred_check
      _
    $region19: #{tpu_custom_call.1} parent=1 // pred_check_branch
      %64 = sbr.rel (0) target = $region21
    $region20: #{tpu_custom_call.1} parent=1 // pred_region
      _
    $region21: #{tpu_custom_call.1} parent=1 // pred_fallthru
      _
    // Predicated region
    $region22: #{tpu_custom_call.1} parent=1 // pred_check
      _
    $region23: #{tpu_custom_call.1} parent=1 // pred_check_branch
      %66 = sbr.rel (0) target = $region25
    $region24: #{tpu_custom_call.1} parent=1 // pred_region
      %s68 = ssub.s32 2048, 2048
      %69 = vsyncadd [#allocation9], %s68
      %s70 = sshll.u32 [#allocation8], 4
      %s71 = int_to_ptr.vmem [resolvable:$true] %s70
      %76 = dma.hbm_to_vmem [thread:$0]  %s5, 2048, %s71, [#allocation9], 128, 128, 8
    $region25: #{tpu_custom_call.1} parent=1 // pred_fallthru
      _
    // Predicated region
    $region26: #{tpu_custom_call.1} parent=1 // pred_check
      _
    $region27: #{tpu_custom_call.1} parent=1 // pred_check_branch
      %78 = sbr.rel (0) target = $region29
    $region28: #{tpu_custom_call.1} parent=1 // pred_region
      _
    $region29: #{tpu_custom_call.1} parent=1 // pred_fallthru
      _
    // Predicated region
    $region30: #{tpu_custom_call.1} parent=1 // pred_check
      _
    $region31: #{tpu_custom_call.1} parent=1 // pred_check_branch
      %80 = sbr.rel (0) target = $region33
    $region32: #{tpu_custom_call.1} parent=1 // pred_region
      %s82 = ssub.s32 2048, 2048
      %83 = vsyncadd [#allocation9], %s82
      %s84 = sshll.u32 [#allocation10], 4
      %s85 = int_to_ptr.vmem [resolvable:$true] %s84
      %90 = dma.hbm_to_vmem [thread:$0]  %s7, 2048, %s85, [#allocation9], 128, 128, 8
    $region33: #{tpu_custom_call.1} parent=1 // pred_fallthru
      _
    // Predicated region
    $region34: #{tpu_custom_call.1} parent=1 // pred_check
      _
    $region35: #{tpu_custom_call.1} parent=1 // pred_check_branch
      %92 = sbr.rel (0) target = $region37
    $region36: #{tpu_custom_call.1} parent=1 // pred_region
      _
    $region37: #{tpu_custom_call.1} parent=1 // pred_fallthru
      _
    // Predicated region
    $region38: #{tpu_custom_call.1} parent=1 // pred_check
      _
    $region39: #{tpu_custom_call.1} parent=1 // pred_check_branch
      %94 = sbr.rel (0) target = $region41
    $region40: #{tpu_custom_call.1} parent=1 // pred_region
      %s96 = ssub.s32 2048, 2048
      %97 = vsyncadd [#allocation12], %s96
      %s98 = sshll.u32 [#allocation11], 4
      %s99 = int_to_ptr.vmem [resolvable:$true] %s98
      %104 = dma.hbm_to_vmem [thread:$0]  %s9, 2048, %s99, [#allocation12], 128, 128, 8
    $region41: #{tpu_custom_call.1} parent=1 // pred_fallthru
      _
    // Predicated region
    $region42: #{tpu_custom_call.1} parent=1 // pred_check
      _
    $region43: #{tpu_custom_call.1} parent=1 // pred_check_branch
      %106 = sbr.rel (0) target = $region45
    $region44: #{tpu_custom_call.1} parent=1 // pred_region
      _
    $region45: #{tpu_custom_call.1} parent=1 // pred_fallthru
      _
    // Predicated region
    $region46: #{tpu_custom_call.1} parent=1 // pred_check
      _
    $region47: #{tpu_custom_call.1} parent=1 // pred_check_branch
      %108 = sbr.rel (0) target = $region49
    $region48: #{tpu_custom_call.1} parent=1 // pred_region
      %s110 = ssub.s32 2048, 2048
      %111 = vsyncadd [#allocation12], %s110
      %s112 = sshll.u32 [#allocation13], 4
      %s113 = int_to_ptr.vmem [resolvable:$true] %s112
      %118 = dma.hbm_to_vmem [thread:$0]  %s11, 2048, %s113, [#allocation12], 128, 128, 8
    $region49: #{tpu_custom_call.1} parent=1 // pred_fallthru
      _
    // Predicated region
    $region50: #{tpu_custom_call.1} parent=1 // pred_check
      _
    $region51: #{tpu_custom_call.1} parent=1 // pred_check_branch
      %120 = sbr.rel (0) target = $region53
    $region52: #{tpu_custom_call.1} parent=1 // pred_region
      _
    $region53: #{tpu_custom_call.1} parent=1 // pred_fallthru
      _
    // Predicated region
    $region54: #{tpu_custom_call.1} parent=1 // pred_check
      _
    $region55: #{tpu_custom_call.1} parent=1 // pred_check_branch
      %122 = sbr.rel (0) target = $region57
    $region56: #{tpu_custom_call.1} parent=1 // pred_region
      %s124 = ssub.s32 2048, 2048
      %125 = vsyncadd [#allocation15], %s124
      %s126 = sshll.u32 [#allocation14], 4
      %s127 = int_to_ptr.vmem [resolvable:$true] %s126
      %132 = dma.hbm_to_vmem [thread:$0]  %s13, 2048, %s127, [#allocation15], 128, 128, 8
    $region57: #{tpu_custom_call.1} parent=1 // pred_fallthru
      _
    // Predicated region
    $region58: #{tpu_custom_call.1} parent=1 // pred_check
      _
    $region59: #{tpu_custom_call.1} parent=1 // pred_check_branch
      %134 = sbr.rel (0) target = $region61
    $region60: #{tpu_custom_call.1} parent=1 // pred_region
      _
    $region61: #{tpu_custom_call.1} parent=1 // pred_fallthru
      _
    // Predicated region
    $region62: #{tpu_custom_call.1} parent=1 // pred_check
      _
    $region63: #{tpu_custom_call.1} parent=1 // pred_check_branch
      %136 = sbr.rel (0) target = $region65
    $region64: #{tpu_custom_call.1} parent=1 // pred_region
      %137 = dma.done [#allocation3], 64
    $region65: #{tpu_custom_call.1} parent=1 // pred_fallthru
      _
    // Predicated region
    $region66: #{tpu_custom_call.1} parent=1 // pred_check
      _
    $region67: #{tpu_custom_call.1} parent=1 // pred_check_branch
      %139 = sbr.rel (0) target = $region69
    $region68: #{tpu_custom_call.1} parent=1 // pred_region
      %140 = dma.done [#allocation6], 128
    $region69: #{tpu_custom_call.1} parent=1 // pred_fallthru
      _
    // Predicated region
    $region70: #{tpu_custom_call.1} parent=1 // pred_check
      _
    $region71: #{tpu_custom_call.1} parent=1 // pred_check_branch
      %142 = sbr.rel (0) target = $region73
    $region72: #{tpu_custom_call.1} parent=1 // pred_region
      %143 = dma.done [#allocation6], 2048
    $region73: #{tpu_custom_call.1} parent=1 // pred_fallthru
      _
    // Predicated region
    $region74: #{tpu_custom_call.1} parent=1 // pred_check
      _
    $region75: #{tpu_custom_call.1} parent=1 // pred_check_branch
      %145 = sbr.rel (0) target = $region77
    $region76: #{tpu_custom_call.1} parent=1 // pred_region
      %146 = dma.done [#allocation9], 2048
    $region77: #{tpu_custom_call.1} parent=1 // pred_fallthru
      _
    // Predicated region
    $region78: #{tpu_custom_call.1} parent=1 // pred_check
      _
    $region79: #{tpu_custom_call.1} parent=1 // pred_check_branch
      %148 = sbr.rel (0) target = $region81
    $region80: #{tpu_custom_call.1} parent=1 // pred_region
      %149 = dma.done [#allocation9], 2048
    $region81: #{tpu_custom_call.1} parent=1 // pred_fallthru
      _
    // Predicated region
    $region82: #{tpu_custom_call.1} parent=1 // pred_check
      _
    $region83: #{tpu_custom_call.1} parent=1 // pred_check_branch
      %151 = sbr.rel (0) target = $region85
    $region84: #{tpu_custom_call.1} parent=1 // pred_region
      %152 = dma.done [#allocation12], 2048
    $region85: #{tpu_custom_call.1} parent=1 // pred_fallthru
      _
    // Predicated region
    $region86: #{tpu_custom_call.1} parent=1 // pred_check
      _
    $region87: #{tpu_custom_call.1} parent=1 // pred_check_branch
      %154 = sbr.rel (0) target = $region89
    $region88: #{tpu_custom_call.1} parent=1 // pred_region
      %155 = dma.done [#allocation12], 2048
    $region89: #{tpu_custom_call.1} parent=1 // pred_fallthru
      _
    // Predicated region
    $region90: #{tpu_custom_call.1} parent=1 // pred_check
      _
    $region91: #{tpu_custom_call.1} parent=1 // pred_check_branch
      %157 = sbr.rel (0) target = $region93
    $region92: #{tpu_custom_call.1} parent=1 // pred_region
      %158 = dma.done [#allocation15], 2048
    $region93: #{tpu_custom_call.1} parent=1 // pred_fallthru
      _
    %v160 = vld [vmem:[#allocation2] sm:$0xf]
    %v161 = vld [vmem:[%s1] sm:$0x1]
    %v162 = vld [vmem:[#allocation5] sm:$0xff]
    %v163 = vld [vmem:[#allocation7] sm:$0xff]
    %v164 = vld [vmem:[#allocation7 + $0x8] sm:$0xff]
    %v165 = vld [vmem:[#allocation7 + $0x10] sm:$0xff]
    %v166 = vld [vmem:[#allocation7 + $0x18] sm:$0xff]
    %v167 = vld [vmem:[#allocation7 + $0x20] sm:$0xff]
    %v168 = vld [vmem:[#allocation7 + $0x28] sm:$0xff]
    %v169 = vld [vmem:[#allocation7 + $0x30] sm:$0xff]
    %v170 = vld [vmem:[#allocation7 + $0x38] sm:$0xff]
    %v171 = vld [vmem:[#allocation7 + $0x40] sm:$0xff]
    %v172 = vld [vmem:[#allocation7 + $0x48] sm:$0xff]
    %v173 = vld [vmem:[#allocation7 + $0x50] sm:$0xff]
    %v174 = vld [vmem:[#allocation7 + $0x58] sm:$0xff]
    %v175 = vld [vmem:[#allocation7 + $0x60] sm:$0xff]
    %v176 = vld [vmem:[#allocation7 + $0x68] sm:$0xff]
    %v177 = vld [vmem:[#allocation7 + $0x70] sm:$0xff]
    %v178 = vld [vmem:[#allocation7 + $0x78] sm:$0xff]
    %v179 = vld [vmem:[%s4] sm:$0x1]
    %v180 = vld [vmem:[#allocation8] sm:$0xff]
    %v181 = vld [vmem:[#allocation8 + $0x8] sm:$0xff]
    %v182 = vld [vmem:[#allocation8 + $0x10] sm:$0xff]
    %v183 = vld [vmem:[#allocation8 + $0x18] sm:$0xff]
    %v184 = vld [vmem:[#allocation8 + $0x20] sm:$0xff]
    %v185 = vld [vmem:[#allocation8 + $0x28] sm:$0xff]
    %v186 = vld [vmem:[#allocation8 + $0x30] sm:$0xff]
    %v187 = vld [vmem:[#allocation8 + $0x38] sm:$0xff]
    %v188 = vld [vmem:[#allocation8 + $0x40] sm:$0xff]
    %v189 = vld [vmem:[#allocation8 + $0x48] sm:$0xff]
    %v190 = vld [vmem:[#allocation8 + $0x50] sm:$0xff]
    %v191 = vld [vmem:[#allocation8 + $0x58] sm:$0xff]
    %v192 = vld [vmem:[#allocation8 + $0x60] sm:$0xff]
    %v193 = vld [vmem:[#allocation8 + $0x68] sm:$0xff]
    %v194 = vld [vmem:[#allocation8 + $0x70] sm:$0xff]
    %v195 = vld [vmem:[#allocation8 + $0x78] sm:$0xff]
    %v196 = vld [vmem:[%s6] sm:$0x1]
    %v197 = vpack.c.bf16 %v162, %v162
    %vm198 = vcmask 64512
    %v200 = vsel %vm198, %v160, 0
    %vm202 = vcmask 1043456
    %v204 = vsel %vm202, %v197, 0
    %206 = vmatprep.subr.bf16.mxu0 0
    %207 = vmatpush1.bf16.msra.mxu0 0
    %208 = vmatprep.subr.bf16.mxu0 0
    %209 = vmatpush1.bf16.msra.mxu0 0
    %210 = vmatprep.subr.bf16.mxu0 0
    %211 = vmatpush1.bf16.msra.mxu0 0
    %212 = vmatprep.subr.bf16.mxu0 0
    %213 = vmatpush1.bf16.msra.mxu0 0
    %214 = vmatprep.subr.bf16.mxu0 0
    %215 = vmatpush1.bf16.msra.mxu0 0
    %216 = vmatprep.subr.bf16.mxu0 0
    %217 = vmatpush1.bf16.msra.mxu0 0
    %218 = vmatprep.subr.bf16.mxu0 0
    %219 = vmatpush1.bf16.msra.mxu0 0
    %220 = vmatprep.subr.bf16.mxu0 0
    %221 = vmatpush1.bf16.msra.mxu0 %v204
    %222 = vmatprep.subr.bf16.mxu0 0
    %223 = vmatpush2.bf16.msra.mxu0 0
    %224 = vmatprep.subr.bf16.mxu0 0
    %225 = vmatpush2.bf16.msra.mxu0 0
    %226 = vmatprep.subr.bf16.mxu0 0
    %227 = vmatpush2.bf16.msra.mxu0 0
    %228 = vmatprep.subr.bf16.mxu0 0
    %229 = vmatpush2.bf16.msra.mxu0 0
    %230 = vmatprep.subr.bf16.mxu0 0
    %231 = vmatpush2.bf16.msra.mxu0 0
    %232 = vmatprep.subr.bf16.mxu0 0
    %233 = vmatpush2.bf16.msra.mxu0 0
    %234 = vmatprep.subr.bf16.mxu0 0
    %235 = vmatpush2.bf16.msra.mxu0 0
    %236 = vmatprep.subr.bf16.mxu0 0
    %237 = vmatpush2.bf16.msra.mxu0 0
    %238 = vmatprep.mubr.bf16.mxu0 0
    %239 = vmatmul.mubr.bf16.gmra.mxu0 %v200
    %v240 = vpop.f32.mrf.mxu0
    %v241 = vadd.f32 0.0, %v240
    %v242 = vpop.f32.mrf.mxu0
    %v243 = vpop.f32.mrf.mxu0
    %v244 = vpop.f32.mrf.mxu0
    %245 = vdwg.mxu0
    %v246 = vadd.f32 %v162, %v241
    %v248 = vlaneseq
    %v249 = vshrl.u32 %v248, 7
    %v250 = vsub.s32 0, %v249
    %v251 = vrot.slane %v179, %v250
    %253 = vmatprep.subr.mxu0 0.0
    %254 = vmatpush1.msra.mxu0 %v178
    %255 = vmatprep.subr.mxu0 0.0
    %256 = vmatpush1.msra.mxu0 %v177
    %257 = vmatprep.subr.mxu0 0.0
    %258 = vmatpush1.msra.mxu0 %v176
    %259 = vmatprep.subr.mxu0 0.0
    %260 = vmatpush1.msra.mxu0 %v175
    %261 = vmatprep.subr.mxu0 0.0
    %262 = vmatpush1.msra.mxu0 %v174
    %263 = vmatprep.subr.mxu0 0.0
    %264 = vmatpush1.msra.mxu0 %v173
    %265 = vmatprep.subr.mxu0 0.0
    %266 = vmatpush1.msra.mxu0 %v172
    %267 = vmatprep.subr.mxu0 0.0
    %268 = vmatpush1.msra.mxu0 %v171
    %269 = vmatprep.subr.mxu0 0.0
    %270 = vmatpush1.msra.mxu0 %v170
    %271 = vmatprep.subr.mxu0 0.0
    %272 = vmatpush1.msra.mxu0 %v169
    %273 = vmatprep.subr.mxu0 0.0
    %274 = vmatpush1.msra.mxu0 %v168
    %275 = vmatprep.subr.mxu0 0.0
    %276 = vmatpush1.msra.mxu0 %v167
    %277 = vmatprep.subr.mxu0 0.0
    %278 = vmatpush1.msra.mxu0 %v166
    %279 = vmatprep.subr.mxu0 0.0
    %280 = vmatpush1.msra.mxu0 %v165
    %281 = vmatprep.subr.mxu0 0.0
    %282 = vmatpush1.msra.mxu0 %v164
    %283 = vmatprep.subr.mxu0 0.0
    %284 = vmatpush1.msra.mxu0 %v163
    %285 = vmatprep.subr.mxu0 0.0
    %286 = vmatpush2.msra.mxu0 0.0
    %287 = vmatprep.subr.mxu0 0.0
    %288 = vmatpush2.msra.mxu0 0.0
    %289 = vmatprep.subr.mxu0 0.0
    %290 = vmatpush2.msra.mxu0 0.0
    %291 = vmatprep.subr.mxu0 0.0
    %292 = vmatpush2.msra.mxu0 0.0
    %293 = vmatprep.subr.mxu0 0.0
    %294 = vmatpush2.msra.mxu0 0.0
    %295 = vmatprep.subr.mxu0 0.0
    %296 = vmatpush2.msra.mxu0 0.0
    %297 = vmatprep.subr.mxu0 0.0
    %298 = vmatpush2.msra.mxu0 0.0
    %299 = vmatprep.subr.mxu0 0.0
    %300 = vmatpush2.msra.mxu0 0.0
    %301 = vmatprep.subr.mxu0 0.0
    %302 = vmatpush2.msra.mxu0 0.0
    %303 = vmatprep.subr.mxu0 0.0
    %304 = vmatpush2.msra.mxu0 0.0
    %305 = vmatprep.subr.mxu0 0.0
    %306 = vmatpush2.msra.mxu0 0.0
    %307 = vmatprep.subr.mxu0 0.0
    %308 = vmatpush2.msra.mxu0 0.0
    %309 = vmatprep.subr.mxu0 0.0
    %310 = vmatpush2.msra.mxu0 0.0
    %311 = vmatprep.subr.mxu0 0.0
    %312 = vmatpush2.msra.mxu0 0.0
    %313 = vmatprep.subr.mxu0 0.0
    %314 = vmatpush2.msra.mxu0 0.0
    %315 = vmatprep.subr.mxu0 0.0
    %316 = vmatpush2.msra.mxu0 0.0
    %317 = vmatprep.mubr.f32.mxu0 0.0
    %318 = vmatmul.mubr.f32.gmra.mxu0 %v246
    %v319 = vpop.f32.mrf.mxu0
    %v320 = vadd.f32 %v251, %v319
    %v321 = vpop.f32.mrf.mxu0
    %322 = vdwg.mxu0
    %v323 = vmax.f32 %v320, 0.0
    %v325 = vlaneseq
    %v326 = vshrl.u32 %v325, 7
    %v327 = vsub.s32 0, %v326
    %v328 = vrot.slane %v196, %v327
    %330 = vmatprep.subr.mxu0 0.0
    %331 = vmatpush1.msra.mxu0 %v195
    %332 = vmatprep.subr.mxu0 0.0
    %333 = vmatpush1.msra.mxu0 %v194
    %334 = vmatprep.subr.mxu0 0.0
    %335 = vmatpush1.msra.mxu0 %v193
    %336 = vmatprep.subr.mxu0 0.0
    %337 = vmatpush1.msra.mxu0 %v192
    %338 = vmatprep.subr.mxu0 0.0
    %339 = vmatpush1.msra.mxu0 %v191
    %340 = vmatprep.subr.mxu0 0.0
    %341 = vmatpush1.msra.mxu0 %v190
    %342 = vmatprep.subr.mxu0 0.0
    %343 = vmatpush1.msra.mxu0 %v189
    %344 = vmatprep.subr.mxu0 0.0
    %345 = vmatpush1.msra.mxu0 %v188
    %346 = vmatprep.subr.mxu0 0.0
    %347 = vmatpush1.msra.mxu0 %v187
    %348 = vmatprep.subr.mxu0 0.0
    %349 = vmatpush1.msra.mxu0 %v186
    %350 = vmatprep.subr.mxu0 0.0
    %351 = vmatpush1.msra.mxu0 %v185
    %352 = vmatprep.subr.mxu0 0.0
    %353 = vmatpush1.msra.mxu0 %v184
    %354 = vmatprep.subr.mxu0 0.0
    %355 = vmatpush1.msra.mxu0 %v183
    %356 = vmatprep.subr.mxu0 0.0
    %357 = vmatpush1.msra.mxu0 %v182
    %358 = vmatprep.subr.mxu0 0.0
    %359 = vmatpush1.msra.mxu0 %v181
    %360 = vmatprep.subr.mxu0 0.0
    %361 = vmatpush1.msra.mxu0 %v180
    %362 = vmatprep.subr.mxu0 0.0
    %363 = vmatpush2.msra.mxu0 0.0
    %364 = vmatprep.subr.mxu0 0.0
    %365 = vmatpush2.msra.mxu0 0.0
    %366 = vmatprep.subr.mxu0 0.0
    %367 = vmatpush2.msra.mxu0 0.0
    %368 = vmatprep.subr.mxu0 0.0
    %369 = vmatpush2.msra.mxu0 0.0
    %370 = vmatprep.subr.mxu0 0.0
    %371 = vmatpush2.msra.mxu0 0.0
    %372 = vmatprep.subr.mxu0 0.0
    %373 = vmatpush2.msra.mxu0 0.0
    %374 = vmatprep.subr.mxu0 0.0
    %375 = vmatpush2.msra.mxu0 0.0
    %376 = vmatprep.subr.mxu0 0.0
    %377 = vmatpush2.msra.mxu0 0.0
    %378 = vmatprep.subr.mxu0 0.0
    %379 = vmatpush2.msra.mxu0 0.0
    %380 = vmatprep.subr.mxu0 0.0
    %381 = vmatpush2.msra.mxu0 0.0
    %382 = vmatprep.subr.mxu0 0.0
    %383 = vmatpush2.msra.mxu0 0.0
    %384 = vmatprep.subr.mxu0 0.0
    %385 = vmatpush2.msra.mxu0 0.0
    %386 = vmatprep.subr.mxu0 0.0
    %387 = vmatpush2.msra.mxu0 0.0
    %388 = vmatprep.subr.mxu0 0.0
    %389 = vmatpush2.msra.mxu0 0.0
    %390 = vmatprep.subr.mxu0 0.0
    %391 = vmatpush2.msra.mxu0 0.0
    %392 = vmatprep.subr.mxu0 0.0
    %393 = vmatpush2.msra.mxu0 0.0
    %394 = vmatprep.mubr.f32.mxu0 0.0
    %395 = vmatmul.mubr.f32.gmra.mxu0 %v323
    %v396 = vpop.f32.mrf.mxu0
    %v397 = vadd.f32 %v328, %v396
    %v398 = vpop.f32.mrf.mxu0
    %399 = vdwg.mxu0
    %v400 = vmax.f32 %v397, 0.0
    %401 = vst [vmem:[#allocation17] sm:$0xff] %v400
    %v402 = vpack.c.bf16 %v400, %v400
    %v404 = vsel %vm198, %v161, 0
    %v407 = vsel %vm202, %v402, 0
    %409 = vmatprep.subr.bf16.mxu0 0
    %410 = vmatpush1.bf16.msra.mxu0 0
    %411 = vmatprep.subr.bf16.mxu0 0
    %412 = vmatpush1.bf16.msra.mxu0 0
    %413 = vmatprep.subr.bf16.mxu0 0
    %414 = vmatpush1.bf16.msra.mxu0 0
    %415 = vmatprep.subr.bf16.mxu0 0
    %416 = vmatpush1.bf16.msra.mxu0 0
    %417 = vmatprep.subr.bf16.mxu0 0
    %418 = vmatpush1.bf16.msra.mxu0 0
    %419 = vmatprep.subr.bf16.mxu0 0
    %420 = vmatpush1.bf16.msra.mxu0 0
    %421 = vmatprep.subr.bf16.mxu0 0
    %422 = vmatpush1.bf16.msra.mxu0 0
    %423 = vmatprep.subr.bf16.mxu0 0
    %424 = vmatpush1.bf16.msra.mxu0 %v407
    %425 = vmatprep.subr.bf16.mxu0 0
    %426 = vmatpush2.bf16.msra.mxu0 0
    %427 = vmatprep.subr.bf16.mxu0 0
    %428 = vmatpush2.bf16.msra.mxu0 0
    %429 = vmatprep.subr.bf16.mxu0 0
    %430 = vmatpush2.bf16.msra.mxu0 0
    %431 = vmatprep.subr.bf16.mxu0 0
    %432 = vmatpush2.bf16.msra.mxu0 0
    %433 = vmatprep.subr.bf16.mxu0 0
    %434 = vmatpush2.bf16.msra.mxu0 0
    %435 = vmatprep.subr.bf16.mxu0 0
    %436 = vmatpush2.bf16.msra.mxu0 0
    %437 = vmatprep.subr.bf16.mxu0 0
    %438 = vmatpush2.bf16.msra.mxu0 0
    %439 = vmatprep.subr.bf16.mxu0 0
    %440 = vmatpush2.bf16.msra.mxu0 0
    %441 = vmatprep.mubr.bf16.mxu0 0
    %442 = vmatmul.mubr.bf16.gmra.mxu0 %v404
    %v443 = vpop.f32.mrf.mxu0
    %v444 = vadd.f32 0.0, %v443
    %v445 = vpop.f32.mrf.mxu0
    %v446 = vpop.f32.mrf.mxu0
    %v447 = vpop.f32.mrf.mxu0
    %448 = vdwg.mxu0
    %449 = vst [vmem:[#allocation16] sm:$0x3] %v444
    %v450 = vld [vmem:[#allocation10] sm:$0xff]
    %v451 = vld [vmem:[#allocation10 + $0x8] sm:$0xff]
    %v452 = vld [vmem:[#allocation10 + $0x10] sm:$0xff]
    %v453 = vld [vmem:[#allocation10 + $0x18] sm:$0xff]
    %v454 = vld [vmem:[#allocation10 + $0x20] sm:$0xff]
    %v455 = vld [vmem:[#allocation10 + $0x28] sm:$0xff]
    %v456 = vld [vmem:[#allocation10 + $0x30] sm:$0xff]
    %v457 = vld [vmem:[#allocation10 + $0x38] sm:$0xff]
    %v458 = vld [vmem:[#allocation10 + $0x40] sm:$0xff]
    %v459 = vld [vmem:[#allocation10 + $0x48] sm:$0xff]
    %v460 = vld [vmem:[#allocation10 + $0x50] sm:$0xff]
    %v461 = vld [vmem:[#allocation10 + $0x58] sm:$0xff]
    %v462 = vld [vmem:[#allocation10 + $0x60] sm:$0xff]
    %v463 = vld [vmem:[#allocation10 + $0x68] sm:$0xff]
    %v464 = vld [vmem:[#allocation10 + $0x70] sm:$0xff]
    %v465 = vld [vmem:[#allocation10 + $0x78] sm:$0xff]
    %v466 = vld [vmem:[%s8] sm:$0x1]
    %v467 = vld [vmem:[#allocation11] sm:$0xff]
    %v468 = vld [vmem:[#allocation11 + $0x8] sm:$0xff]
    %v469 = vld [vmem:[#allocation11 + $0x10] sm:$0xff]
    %v470 = vld [vmem:[#allocation11 + $0x18] sm:$0xff]
    %v471 = vld [vmem:[#allocation11 + $0x20] sm:$0xff]
    %v472 = vld [vmem:[#allocation11 + $0x28] sm:$0xff]
    %v473 = vld [vmem:[#allocation11 + $0x30] sm:$0xff]
    %v474 = vld [vmem:[#allocation11 + $0x38] sm:$0xff]
    %v475 = vld [vmem:[#allocation11 + $0x40] sm:$0xff]
    %v476 = vld [vmem:[#allocation11 + $0x48] sm:$0xff]
    %v477 = vld [vmem:[#allocation11 + $0x50] sm:$0xff]
    %v478 = vld [vmem:[#allocation11 + $0x58] sm:$0xff]
    %v479 = vld [vmem:[#allocation11 + $0x60] sm:$0xff]
    %v480 = vld [vmem:[#allocation11 + $0x68] sm:$0xff]
    %v481 = vld [vmem:[#allocation11 + $0x70] sm:$0xff]
    %v482 = vld [vmem:[#allocation11 + $0x78] sm:$0xff]
    %v483 = vld [vmem:[%s10] sm:$0x1]
    %484 = vmatprep.subr.bf16.mxu0 0
    %485 = vmatpush1.bf16.msra.mxu0 0
    %486 = vmatprep.subr.bf16.mxu0 0
    %487 = vmatpush1.bf16.msra.mxu0 0
    %488 = vmatprep.subr.bf16.mxu0 0
    %489 = vmatpush1.bf16.msra.mxu0 0
    %490 = vmatprep.subr.bf16.mxu0 0
    %491 = vmatpush1.bf16.msra.mxu0 0
    %492 = vmatprep.subr.bf16.mxu0 0
    %493 = vmatpush1.bf16.msra.mxu0 0
    %494 = vmatprep.subr.bf16.mxu0 0
    %495 = vmatpush1.bf16.msra.mxu0 0
    %496 = vmatprep.subr.bf16.mxu0 0
    %497 = vmatpush1.bf16.msra.mxu0 0
    %498 = vmatprep.subr.bf16.mxu0 0
    %499 = vmatpush1.bf16.msra.mxu0 %v407
    %500 = vmatprep.subr.bf16.mxu0 0
    %501 = vmatpush2.bf16.msra.mxu0 0
    %502 = vmatprep.subr.bf16.mxu0 0
    %503 = vmatpush2.bf16.msra.mxu0 0
    %504 = vmatprep.subr.bf16.mxu0 0
    %505 = vmatpush2.bf16.msra.mxu0 0
    %506 = vmatprep.subr.bf16.mxu0 0
    %507 = vmatpush2.bf16.msra.mxu0 0
    %508 = vmatprep.subr.bf16.mxu0 0
    %509 = vmatpush2.bf16.msra.mxu0 0
    %510 = vmatprep.subr.bf16.mxu0 0
    %511 = vmatpush2.bf16.msra.mxu0 0
    %512 = vmatprep.subr.bf16.mxu0 0
    %513 = vmatpush2.bf16.msra.mxu0 0
    %514 = vmatprep.subr.bf16.mxu0 0
    %515 = vmatpush2.bf16.msra.mxu0 0
    %516 = vmatprep.mubr.bf16.mxu0 0
    %517 = vmatmul.mubr.bf16.gmra.mxu0 %v200
    %v518 = vpop.f32.mrf.mxu0
    %v519 = vadd.f32 0.0, %v518
    %v520 = vpop.f32.mrf.mxu0
    %v521 = vpop.f32.mrf.mxu0
    %v522 = vpop.f32.mrf.mxu0
    %523 = vdwg.mxu0
    %v524 = vadd.f32 %v400, %v519
    %v526 = vlaneseq
    %v527 = vshrl.u32 %v526, 7
    %v528 = vsub.s32 0, %v527
    %v529 = vrot.slane %v466, %v528
    %531 = vmatprep.subr.mxu0 0.0
    %532 = vmatpush1.msra.mxu0 %v465
    %533 = vmatprep.subr.mxu0 0.0
    %534 = vmatpush1.msra.mxu0 %v464
    %535 = vmatprep.subr.mxu0 0.0
    %536 = vmatpush1.msra.mxu0 %v463
    %537 = vmatprep.subr.mxu0 0.0
    %538 = vmatpush1.msra.mxu0 %v462
    %539 = vmatprep.subr.mxu0 0.0
    %540 = vmatpush1.msra.mxu0 %v461
    %541 = vmatprep.subr.mxu0 0.0
    %542 = vmatpush1.msra.mxu0 %v460
    %543 = vmatprep.subr.mxu0 0.0
    %544 = vmatpush1.msra.mxu0 %v459
    %545 = vmatprep.subr.mxu0 0.0
    %546 = vmatpush1.msra.mxu0 %v458
    %547 = vmatprep.subr.mxu0 0.0
    %548 = vmatpush1.msra.mxu0 %v457
    %549 = vmatprep.subr.mxu0 0.0
    %550 = vmatpush1.msra.mxu0 %v456
    %551 = vmatprep.subr.mxu0 0.0
    %552 = vmatpush1.msra.mxu0 %v455
    %553 = vmatprep.subr.mxu0 0.0
    %554 = vmatpush1.msra.mxu0 %v454
    %555 = vmatprep.subr.mxu0 0.0
    %556 = vmatpush1.msra.mxu0 %v453
    %557 = vmatprep.subr.mxu0 0.0
    %558 = vmatpush1.msra.mxu0 %v452
    %559 = vmatprep.subr.mxu0 0.0
    %560 = vmatpush1.msra.mxu0 %v451
    %561 = vmatprep.subr.mxu0 0.0
    %562 = vmatpush1.msra.mxu0 %v450
    %563 = vmatprep.subr.mxu0 0.0
    %564 = vmatpush2.msra.mxu0 0.0
    %565 = vmatprep.subr.mxu0 0.0
    %566 = vmatpush2.msra.mxu0 0.0
    %567 = vmatprep.subr.mxu0 0.0
    %568 = vmatpush2.msra.mxu0 0.0
    %569 = vmatprep.subr.mxu0 0.0
    %570 = vmatpush2.msra.mxu0 0.0
    %571 = vmatprep.subr.mxu0 0.0
    %572 = vmatpush2.msra.mxu0 0.0
    %573 = vmatprep.subr.mxu0 0.0
    %574 = vmatpush2.msra.mxu0 0.0
    %575 = vmatprep.subr.mxu0 0.0
    %576 = vmatpush2.msra.mxu0 0.0
    %577 = vmatprep.subr.mxu0 0.0
    %578 = vmatpush2.msra.mxu0 0.0
    %579 = vmatprep.subr.mxu0 0.0
    %580 = vmatpush2.msra.mxu0 0.0
    %581 = vmatprep.subr.mxu0 0.0
    %582 = vmatpush2.msra.mxu0 0.0
    %583 = vmatprep.subr.mxu0 0.0
    %584 = vmatpush2.msra.mxu0 0.0
    %585 = vmatprep.subr.mxu0 0.0
    %586 = vmatpush2.msra.mxu0 0.0
    %587 = vmatprep.subr.mxu0 0.0
    %588 = vmatpush2.msra.mxu0 0.0
    %589 = vmatprep.subr.mxu0 0.0
    %590 = vmatpush2.msra.mxu0 0.0
    %591 = vmatprep.subr.mxu0 0.0
    %592 = vmatpush2.msra.mxu0 0.0
    %593 = vmatprep.subr.mxu0 0.0
    %594 = vmatpush2.msra.mxu0 0.0
    %595 = vmatprep.mubr.f32.mxu0 0.0
    %596 = vmatmul.mubr.f32.gmra.mxu0 %v524
    %v597 = vpop.f32.mrf.mxu0
    %v598 = vadd.f32 %v529, %v597
    %v599 = vpop.f32.mrf.mxu0
    %600 = vdwg.mxu0
    %v601 = vmax.f32 %v598, 0.0
    %v603 = vlaneseq
    %v604 = vshrl.u32 %v603, 7
    %v605 = vsub.s32 0, %v604
    %v606 = vrot.slane %v483, %v605
    %608 = vmatprep.subr.mxu0 0.0
    %609 = vmatpush1.msra.mxu0 %v482
    %610 = vmatprep.subr.mxu0 0.0
    %611 = vmatpush1.msra.mxu0 %v481
    %612 = vmatprep.subr.mxu0 0.0
    %613 = vmatpush1.msra.mxu0 %v480
    %614 = vmatprep.subr.mxu0 0.0
    %615 = vmatpush1.msra.mxu0 %v479
    %616 = vmatprep.subr.mxu0 0.0
    %617 = vmatpush1.msra.mxu0 %v478
    %618 = vmatprep.subr.mxu0 0.0
    %619 = vmatpush1.msra.mxu0 %v477
    %620 = vmatprep.subr.mxu0 0.0
    %621 = vmatpush1.msra.mxu0 %v476
    %622 = vmatprep.subr.mxu0 0.0
    %623 = vmatpush1.msra.mxu0 %v475
    %624 = vmatprep.subr.mxu0 0.0
    %625 = vmatpush1.msra.mxu0 %v474
    %626 = vmatprep.subr.mxu0 0.0
    %627 = vmatpush1.msra.mxu0 %v473
    %628 = vmatprep.subr.mxu0 0.0
    %629 = vmatpush1.msra.mxu0 %v472
    %630 = vmatprep.subr.mxu0 0.0
    %631 = vmatpush1.msra.mxu0 %v471
    %632 = vmatprep.subr.mxu0 0.0
    %633 = vmatpush1.msra.mxu0 %v470
    %634 = vmatprep.subr.mxu0 0.0
    %635 = vmatpush1.msra.mxu0 %v469
    %636 = vmatprep.subr.mxu0 0.0
    %637 = vmatpush1.msra.mxu0 %v468
    %638 = vmatprep.subr.mxu0 0.0
    %639 = vmatpush1.msra.mxu0 %v467
    %640 = vmatprep.subr.mxu0 0.0
    %641 = vmatpush2.msra.mxu0 0.0
    %642 = vmatprep.subr.mxu0 0.0
    %643 = vmatpush2.msra.mxu0 0.0
    %644 = vmatprep.subr.mxu0 0.0
    %645 = vmatpush2.msra.mxu0 0.0
    %646 = vmatprep.subr.mxu0 0.0
    %647 = vmatpush2.msra.mxu0 0.0
    %648 = vmatprep.subr.mxu0 0.0
    %649 = vmatpush2.msra.mxu0 0.0
    %650 = vmatprep.subr.mxu0 0.0
    %651 = vmatpush2.msra.mxu0 0.0
    %652 = vmatprep.subr.mxu0 0.0
    %653 = vmatpush2.msra.mxu0 0.0
    %654 = vmatprep.subr.mxu0 0.0
    %655 = vmatpush2.msra.mxu0 0.0
    %656 = vmatprep.subr.mxu0 0.0
    %657 = vmatpush2.msra.mxu0 0.0
    %658 = vmatprep.subr.mxu0 0.0
    %659 = vmatpush2.msra.mxu0 0.0
    %660 = vmatprep.subr.mxu0 0.0
    %661 = vmatpush2.msra.mxu0 0.0
    %662 = vmatprep.subr.mxu0 0.0
    %663 = vmatpush2.msra.mxu0 0.0
    %664 = vmatprep.subr.mxu0 0.0
    %665 = vmatpush2.msra.mxu0 0.0
    %666 = vmatprep.subr.mxu0 0.0
    %667 = vmatpush2.msra.mxu0 0.0
    %668 = vmatprep.subr.mxu0 0.0
    %669 = vmatpush2.msra.mxu0 0.0
    %670 = vmatprep.subr.mxu0 0.0
    %671 = vmatpush2.msra.mxu0 0.0
    %672 = vmatprep.mubr.f32.mxu0 0.0
    %673 = vmatmul.mubr.f32.gmra.mxu0 %v601
    %v674 = vpop.f32.mrf.mxu0
    %v675 = vadd.f32 %v606, %v674
    %v676 = vpop.f32.mrf.mxu0
    %677 = vdwg.mxu0
    %v678 = vmax.f32 %v675, 0.0
    %679 = vst [vmem:[#allocation17 + $0x8] sm:$0xff] %v678
    %v680 = vpack.c.bf16 %v678, %v678
    %v682 = vsel %vm202, %v680, 0
    %684 = vmatprep.subr.bf16.mxu0 0
    %685 = vmatpush1.bf16.msra.mxu0 0
    %686 = vmatprep.subr.bf16.mxu0 0
    %687 = vmatpush1.bf16.msra.mxu0 0
    %688 = vmatprep.subr.bf16.mxu0 0
    %689 = vmatpush1.bf16.msra.mxu0 0
    %690 = vmatprep.subr.bf16.mxu0 0
    %691 = vmatpush1.bf16.msra.mxu0 0
    %692 = vmatprep.subr.bf16.mxu0 0
    %693 = vmatpush1.bf16.msra.mxu0 0
    %694 = vmatprep.subr.bf16.mxu0 0
    %695 = vmatpush1.bf16.msra.mxu0 0
    %696 = vmatprep.subr.bf16.mxu0 0
    %697 = vmatpush1.bf16.msra.mxu0 0
    %698 = vmatprep.subr.bf16.mxu0 0
    %699 = vmatpush1.bf16.msra.mxu0 %v682
    %700 = vmatprep.subr.bf16.mxu0 0
    %701 = vmatpush2.bf16.msra.mxu0 0
    %702 = vmatprep.subr.bf16.mxu0 0
    %703 = vmatpush2.bf16.msra.mxu0 0
    %704 = vmatprep.subr.bf16.mxu0 0
    %705 = vmatpush2.bf16.msra.mxu0 0
    %706 = vmatprep.subr.bf16.mxu0 0
    %707 = vmatpush2.bf16.msra.mxu0 0
    %708 = vmatprep.subr.bf16.mxu0 0
    %709 = vmatpush2.bf16.msra.mxu0 0
    %710 = vmatprep.subr.bf16.mxu0 0
    %711 = vmatpush2.bf16.msra.mxu0 0
    %712 = vmatprep.subr.bf16.mxu0 0
    %713 = vmatpush2.bf16.msra.mxu0 0
    %714 = vmatprep.subr.bf16.mxu0 0
    %715 = vmatpush2.bf16.msra.mxu0 0
    %716 = vmatprep.mubr.bf16.mxu0 0
    %717 = vmatmul.mubr.bf16.gmra.mxu0 %v404
    %v718 = vpop.f32.mrf.mxu0
    %v719 = vadd.f32 0.0, %v718
    %v720 = vpop.f32.mrf.mxu0
    %v721 = vpop.f32.mrf.mxu0
    %v722 = vpop.f32.mrf.mxu0
    %723 = vdwg.mxu0
    %724 = vst [vmem:[#allocation16 + $0x2] sm:$0x3] %v719
    %v725 = vld [vmem:[#allocation13] sm:$0xff]
    %v726 = vld [vmem:[#allocation13 + $0x8] sm:$0xff]
    %v727 = vld [vmem:[#allocation13 + $0x10] sm:$0xff]
    %v728 = vld [vmem:[#allocation13 + $0x18] sm:$0xff]
    %v729 = vld [vmem:[#allocation13 + $0x20] sm:$0xff]
    %v730 = vld [vmem:[#allocation13 + $0x28] sm:$0xff]
    %v731 = vld [vmem:[#allocation13 + $0x30] sm:$0xff]
    %v732 = vld [vmem:[#allocation13 + $0x38] sm:$0xff]
    %v733 = vld [vmem:[#allocation13 + $0x40] sm:$0xff]
    %v734 = vld [vmem:[#allocation13 + $0x48] sm:$0xff]
    %v735 = vld [vmem:[#allocation13 + $0x50] sm:$0xff]
    %v736 = vld [vmem:[#allocation13 + $0x58] sm:$0xff]
    %v737 = vld [vmem:[#allocation13 + $0x60] sm:$0xff]
    %v738 = vld [vmem:[#allocation13 + $0x68] sm:$0xff]
    %v739 = vld [vmem:[#allocation13 + $0x70] sm:$0xff]
    %v740 = vld [vmem:[#allocation13 + $0x78] sm:$0xff]
    %v741 = vld [vmem:[%s12] sm:$0x1]
    %v742 = vld [vmem:[#allocation14] sm:$0xff]
    %v743 = vld [vmem:[#allocation14 + $0x8] sm:$0xff]
    %v744 = vld [vmem:[#allocation14 + $0x10] sm:$0xff]
    %v745 = vld [vmem:[#allocation14 + $0x18] sm:$0xff]
    %v746 = vld [vmem:[#allocation14 + $0x20] sm:$0xff]
    %v747 = vld [vmem:[#allocation14 + $0x28] sm:$0xff]
    %v748 = vld [vmem:[#allocation14 + $0x30] sm:$0xff]
    %v749 = vld [vmem:[#allocation14 + $0x38] sm:$0xff]
    %v750 = vld [vmem:[#allocation14 + $0x40] sm:$0xff]
    %v751 = vld [vmem:[#allocation14 + $0x48] sm:$0xff]
    %v752 = vld [vmem:[#allocation14 + $0x50] sm:$0xff]
    %v753 = vld [vmem:[#allocation14 + $0x58] sm:$0xff]
    %v754 = vld [vmem:[#allocation14 + $0x60] sm:$0xff]
    %v755 = vld [vmem:[#allocation14 + $0x68] sm:$0xff]
    %v756 = vld [vmem:[#allocation14 + $0x70] sm:$0xff]
    %v757 = vld [vmem:[#allocation14 + $0x78] sm:$0xff]
    %v758 = vld [vmem:[%s14] sm:$0x1]
    %759 = vmatprep.subr.bf16.mxu0 0
    %760 = vmatpush1.bf16.msra.mxu0 0
    %761 = vmatprep.subr.bf16.mxu0 0
    %762 = vmatpush1.bf16.msra.mxu0 0
    %763 = vmatprep.subr.bf16.mxu0 0
    %764 = vmatpush1.bf16.msra.mxu0 0
    %765 = vmatprep.subr.bf16.mxu0 0
    %766 = vmatpush1.bf16.msra.mxu0 0
    %767 = vmatprep.subr.bf16.mxu0 0
    %768 = vmatpush1.bf16.msra.mxu0 0
    %769 = vmatprep.subr.bf16.mxu0 0
    %770 = vmatpush1.bf16.msra.mxu0 0
    %771 = vmatprep.subr.bf16.mxu0 0
    %772 = vmatpush1.bf16.msra.mxu0 0
    %773 = vmatprep.subr.bf16.mxu0 0
    %774 = vmatpush1.bf16.msra.mxu0 %v682
    %775 = vmatprep.subr.bf16.mxu0 0
    %776 = vmatpush2.bf16.msra.mxu0 0
    %777 = vmatprep.subr.bf16.mxu0 0
    %778 = vmatpush2.bf16.msra.mxu0 0
    %779 = vmatprep.subr.bf16.mxu0 0
    %780 = vmatpush2.bf16.msra.mxu0 0
    %781 = vmatprep.subr.bf16.mxu0 0
    %782 = vmatpush2.bf16.msra.mxu0 0
    %783 = vmatprep.subr.bf16.mxu0 0
    %784 = vmatpush2.bf16.msra.mxu0 0
    %785 = vmatprep.subr.bf16.mxu0 0
    %786 = vmatpush2.bf16.msra.mxu0 0
    %787 = vmatprep.subr.bf16.mxu0 0
    %788 = vmatpush2.bf16.msra.mxu0 0
    %789 = vmatprep.subr.bf16.mxu0 0
    %790 = vmatpush2.bf16.msra.mxu0 0
    %791 = vmatprep.mubr.bf16.mxu0 0
    %792 = vmatmul.mubr.bf16.gmra.mxu0 %v200
    %v793 = vpop.f32.mrf.mxu0
    %v794 = vadd.f32 0.0, %v793
    %v795 = vpop.f32.mrf.mxu0
    %v796 = vpop.f32.mrf.mxu0
    %v797 = vpop.f32.mrf.mxu0
    %798 = vdwg.mxu0
    %v799 = vadd.f32 %v678, %v794
    %v801 = vlaneseq
    %v802 = vshrl.u32 %v801, 7
    %v803 = vsub.s32 0, %v802
    %v804 = vrot.slane %v741, %v803
    %806 = vmatprep.subr.mxu0 0.0
    %807 = vmatpush1.msra.mxu0 %v740
    %808 = vmatprep.subr.mxu0 0.0
    %809 = vmatpush1.msra.mxu0 %v739
    %810 = vmatprep.subr.mxu0 0.0
    %811 = vmatpush1.msra.mxu0 %v738
    %812 = vmatprep.subr.mxu0 0.0
    %813 = vmatpush1.msra.mxu0 %v737
    %814 = vmatprep.subr.mxu0 0.0
    %815 = vmatpush1.msra.mxu0 %v736
    %816 = vmatprep.subr.mxu0 0.0
    %817 = vmatpush1.msra.mxu0 %v735
    %818 = vmatprep.subr.mxu0 0.0
    %819 = vmatpush1.msra.mxu0 %v734
    %820 = vmatprep.subr.mxu0 0.0
    %821 = vmatpush1.msra.mxu0 %v733
    %822 = vmatprep.subr.mxu0 0.0
    %823 = vmatpush1.msra.mxu0 %v732
    %824 = vmatprep.subr.mxu0 0.0
    %825 = vmatpush1.msra.mxu0 %v731
    %826 = vmatprep.subr.mxu0 0.0
    %827 = vmatpush1.msra.mxu0 %v730
    %828 = vmatprep.subr.mxu0 0.0
    %829 = vmatpush1.msra.mxu0 %v729
    %830 = vmatprep.subr.mxu0 0.0
    %831 = vmatpush1.msra.mxu0 %v728
    %832 = vmatprep.subr.mxu0 0.0
    %833 = vmatpush1.msra.mxu0 %v727
    %834 = vmatprep.subr.mxu0 0.0
    %835 = vmatpush1.msra.mxu0 %v726
    %836 = vmatprep.subr.mxu0 0.0
    %837 = vmatpush1.msra.mxu0 %v725
    %838 = vmatprep.subr.mxu0 0.0
    %839 = vmatpush2.msra.mxu0 0.0
    %840 = vmatprep.subr.mxu0 0.0
    %841 = vmatpush2.msra.mxu0 0.0
    %842 = vmatprep.subr.mxu0 0.0
    %843 = vmatpush2.msra.mxu0 0.0
    %844 = vmatprep.subr.mxu0 0.0
    %845 = vmatpush2.msra.mxu0 0.0
    %846 = vmatprep.subr.mxu0 0.0
    %847 = vmatpush2.msra.mxu0 0.0
    %848 = vmatprep.subr.mxu0 0.0
    %849 = vmatpush2.msra.mxu0 0.0
    %850 = vmatprep.subr.mxu0 0.0
    %851 = vmatpush2.msra.mxu0 0.0
    %852 = vmatprep.subr.mxu0 0.0
    %853 = vmatpush2.msra.mxu0 0.0
    %854 = vmatprep.subr.mxu0 0.0
    %855 = vmatpush2.msra.mxu0 0.0
    %856 = vmatprep.subr.mxu0 0.0
    %857 = vmatpush2.msra.mxu0 0.0
    %858 = vmatprep.subr.mxu0 0.0
    %859 = vmatpush2.msra.mxu0 0.0
    %860 = vmatprep.subr.mxu0 0.0
    %861 = vmatpush2.msra.mxu0 0.0
    %862 = vmatprep.subr.mxu0 0.0
    %863 = vmatpush2.msra.mxu0 0.0
    %864 = vmatprep.subr.mxu0 0.0
    %865 = vmatpush2.msra.mxu0 0.0
    %866 = vmatprep.subr.mxu0 0.0
    %867 = vmatpush2.msra.mxu0 0.0
    %868 = vmatprep.subr.mxu0 0.0
    %869 = vmatpush2.msra.mxu0 0.0
    %870 = vmatprep.mubr.f32.mxu0 0.0
    %871 = vmatmul.mubr.f32.gmra.mxu0 %v799
    %v872 = vpop.f32.mrf.mxu0
    %v873 = vadd.f32 %v804, %v872
    %v874 = vpop.f32.mrf.mxu0
    %875 = vdwg.mxu0
    %v876 = vmax.f32 %v873, 0.0
    %v878 = vlaneseq
    %v879 = vshrl.u32 %v878, 7
    %v880 = vsub.s32 0, %v879
    %v881 = vrot.slane %v758, %v880
    %883 = vmatprep.subr.mxu0 0.0
    %884 = vmatpush1.msra.mxu0 %v757
    %885 = vmatprep.subr.mxu0 0.0
    %886 = vmatpush1.msra.mxu0 %v756
    %887 = vmatprep.subr.mxu0 0.0
    %888 = vmatpush1.msra.mxu0 %v755
    %889 = vmatprep.subr.mxu0 0.0
    %890 = vmatpush1.msra.mxu0 %v754
    %891 = vmatprep.subr.mxu0 0.0
    %892 = vmatpush1.msra.mxu0 %v753
    %893 = vmatprep.subr.mxu0 0.0
    %894 = vmatpush1.msra.mxu0 %v752
    %895 = vmatprep.subr.mxu0 0.0
    %896 = vmatpush1.msra.mxu0 %v751
    %897 = vmatprep.subr.mxu0 0.0
    %898 = vmatpush1.msra.mxu0 %v750
    %899 = vmatprep.subr.mxu0 0.0
    %900 = vmatpush1.msra.mxu0 %v749
    %901 = vmatprep.subr.mxu0 0.0
    %902 = vmatpush1.msra.mxu0 %v748
    %903 = vmatprep.subr.mxu0 0.0
    %904 = vmatpush1.msra.mxu0 %v747
    %905 = vmatprep.subr.mxu0 0.0
    %906 = vmatpush1.msra.mxu0 %v746
    %907 = vmatprep.subr.mxu0 0.0
    %908 = vmatpush1.msra.mxu0 %v745
    %909 = vmatprep.subr.mxu0 0.0
    %910 = vmatpush1.msra.mxu0 %v744
    %911 = vmatprep.subr.mxu0 0.0
    %912 = vmatpush1.msra.mxu0 %v743
    %913 = vmatprep.subr.mxu0 0.0
    %914 = vmatpush1.msra.mxu0 %v742
    %915 = vmatprep.subr.mxu0 0.0
    %916 = vmatpush2.msra.mxu0 0.0
    %917 = vmatprep.subr.mxu0 0.0
    %918 = vmatpush2.msra.mxu0 0.0
    %919 = vmatprep.subr.mxu0 0.0
    %920 = vmatpush2.msra.mxu0 0.0
    %921 = vmatprep.subr.mxu0 0.0
    %922 = vmatpush2.msra.mxu0 0.0
    %923 = vmatprep.subr.mxu0 0.0
    %924 = vmatpush2.msra.mxu0 0.0
    %925 = vmatprep.subr.mxu0 0.0
    %926 = vmatpush2.msra.mxu0 0.0
    %927 = vmatprep.subr.mxu0 0.0
    %928 = vmatpush2.msra.mxu0 0.0
    %929 = vmatprep.subr.mxu0 0.0
    %930 = vmatpush2.msra.mxu0 0.0
    %931 = vmatprep.subr.mxu0 0.0
    %932 = vmatpush2.msra.mxu0 0.0
    %933 = vmatprep.subr.mxu0 0.0
    %934 = vmatpush2.msra.mxu0 0.0
    %935 = vmatprep.subr.mxu0 0.0
    %936 = vmatpush2.msra.mxu0 0.0
    %937 = vmatprep.subr.mxu0 0.0
    %938 = vmatpush2.msra.mxu0 0.0
    %939 = vmatprep.subr.mxu0 0.0
    %940 = vmatpush2.msra.mxu0 0.0
    %941 = vmatprep.subr.mxu0 0.0
    %942 = vmatpush2.msra.mxu0 0.0
    %943 = vmatprep.subr.mxu0 0.0
    %944 = vmatpush2.msra.mxu0 0.0
    %945 = vmatprep.subr.mxu0 0.0
    %946 = vmatpush2.msra.mxu0 0.0
    %947 = vmatprep.mubr.f32.mxu0 0.0
    %948 = vmatmul.mubr.f32.gmra.mxu0 %v876
    %v949 = vpop.f32.mrf.mxu0
    %v950 = vadd.f32 %v881, %v949
    %v951 = vpop.f32.mrf.mxu0
    %952 = vdwg.mxu0
    %v953 = vmax.f32 %v950, 0.0
    %954 = vst [vmem:[#allocation17 + $0x10] sm:$0xff] %v953
    %v955 = vpack.c.bf16 %v953, %v953
    %v957 = vsel %vm202, %v955, 0
    %959 = vmatprep.subr.bf16.mxu0 0
    %960 = vmatpush1.bf16.msra.mxu0 0
    %961 = vmatprep.subr.bf16.mxu0 0
    %962 = vmatpush1.bf16.msra.mxu0 0
    %963 = vmatprep.subr.bf16.mxu0 0
    %964 = vmatpush1.bf16.msra.mxu0 0
    %965 = vmatprep.subr.bf16.mxu0 0
    %966 = vmatpush1.bf16.msra.mxu0 0
    %967 = vmatprep.subr.bf16.mxu0 0
    %968 = vmatpush1.bf16.msra.mxu0 0
    %969 = vmatprep.subr.bf16.mxu0 0
    %970 = vmatpush1.bf16.msra.mxu0 0
    %971 = vmatprep.subr.bf16.mxu0 0
    %972 = vmatpush1.bf16.msra.mxu0 0
    %973 = vmatprep.subr.bf16.mxu0 0
    %974 = vmatpush1.bf16.msra.mxu0 %v957
    %975 = vmatprep.subr.bf16.mxu0 0
    %976 = vmatpush2.bf16.msra.mxu0 0
    %977 = vmatprep.subr.bf16.mxu0 0
    %978 = vmatpush2.bf16.msra.mxu0 0
    %979 = vmatprep.subr.bf16.mxu0 0
    %980 = vmatpush2.bf16.msra.mxu0 0
    %981 = vmatprep.subr.bf16.mxu0 0
    %982 = vmatpush2.bf16.msra.mxu0 0
    %983 = vmatprep.subr.bf16.mxu0 0
    %984 = vmatpush2.bf16.msra.mxu0 0
    %985 = vmatprep.subr.bf16.mxu0 0
    %986 = vmatpush2.bf16.msra.mxu0 0
    %987 = vmatprep.subr.bf16.mxu0 0
    %988 = vmatpush2.bf16.msra.mxu0 0
    %989 = vmatprep.subr.bf16.mxu0 0
    %990 = vmatpush2.bf16.msra.mxu0 0
    %991 = vmatprep.mubr.bf16.mxu0 0
    %992 = vmatmul.mubr.bf16.gmra.mxu0 %v404
    %v993 = vpop.f32.mrf.mxu0
    %v994 = vadd.f32 0.0, %v993
    %v995 = vpop.f32.mrf.mxu0
    %v996 = vpop.f32.mrf.mxu0
    %v997 = vpop.f32.mrf.mxu0
    %998 = vdwg.mxu0
    %999 = vst [vmem:[#allocation16 + $0x4] sm:$0x3] %v994
    // Predicated region
    $region94: #{tpu_custom_call.1} parent=1 // pred_check
      _
    $region95: #{tpu_custom_call.1} parent=1 // pred_check_branch
      %1001 = sbr.rel (0) target = $region97
    $region96: #{tpu_custom_call.1} parent=1 // pred_region
      %s1003 = ssub.s32 96, 96
      %1004 = vsyncadd [#allocation4], %s1003
      %s1006 = sshll.u32 [#allocation16], 4
      %s1007 = int_to_ptr.vmem [resolvable:$true] %s1006
      %1009 = dma.vmem_to_hbm [thread:$0]  %s1007, 96, %s15, [#allocation4]
    $region97: #{tpu_custom_call.1} parent=1 // pred_fallthru
      _
    // Predicated region
    $region98: #{tpu_custom_call.1} parent=1 // pred_check
      _
    $region99: #{tpu_custom_call.1} parent=1 // pred_check_branch
      %1011 = sbr.rel (0) target = $region101
    $region100: #{tpu_custom_call.1} parent=1 // pred_region
      %s1013 = ssub.s32 384, 384
      %1014 = vsyncadd [#allocation18], %s1013
      %s1016 = sshll.u32 [#allocation17], 4
      %s1017 = int_to_ptr.vmem [resolvable:$true] %s1016
      %1019 = dma.vmem_to_hbm [thread:$0]  %s1017, 384, %s16, [#allocation18]
    $region101: #{tpu_custom_call.1} parent=1 // pred_fallthru
      _
    // Predicated region
    $region102: #{tpu_custom_call.1} parent=1 // pred_check
      _
    $region103: #{tpu_custom_call.1} parent=1 // pred_check_branch
      %1021 = sbr.rel (0) target = $region105
    $region104: #{tpu_custom_call.1} parent=1 // pred_region
      %1022 = dma.done [#allocation4], 96
    $region105: #{tpu_custom_call.1} parent=1 // pred_fallthru
      _
    // Predicated region
    $region106: #{tpu_custom_call.1} parent=1 // pred_check
      _
    $region107: #{tpu_custom_call.1} parent=1 // pred_check_branch
      %1024 = sbr.rel (0) target = $region109
    $region108: #{tpu_custom_call.1} parent=1 // pred_region
      %1025 = dma.done [#allocation18], 384
    $region109: #{tpu_custom_call.1} parent=1 // pred_fallthru
      _
    %1026 = vsyncpa [#allocation3], 1
    %1027 = vsyncpa [#allocation6], 1
    %1028 = vsyncpa [#allocation9], 1
    %1029 = vsyncpa [#allocation12], 1
    %1030 = vsyncpa [#allocation15], 1
    %1031 = vsyncpa [#allocation4], 1
    %1032 = vsyncpa [#allocation18], 1

</llo_original>
